<compile_context>
chip_gen: v7x
topology: tpu7x:2x2x1
jax: 0.10.0
libtpu: 0.0.40
codegen_flags: <defaults>
</compile_context>

<pallas_src>
import jax
import jax.numpy as jnp
from jax.experimental import pallas as pl
from jax.experimental.pallas import tpu as pltpu


def ffm_kernel(x_ref, y_ref, w_ref, scale_ref, bias_ref, fc1_ref, fc2_ref,
               out_ref):
    """One grid step == one batch element, channels-first, fully fused in VMEM."""
    xv = x_ref[0]                                        # (Cx, P)
    yv = y_ref[0]                                        # (Cy, P)

    # Fuse the channel concat in VMEM -> single K = Cx + Cy matmul on the MXU.
    xy = jnp.concatenate([xv, yv], axis=0)               # (Cin, P)

    # 1x1 conv (channels-first): (Cout, Cin) @ (Cin, P) -> (Cout, P)
    z = jnp.dot(w_ref[...], xy, preferred_element_type=jnp.float32)

    # BatchNorm (inference, folded per-channel scale/bias) + ReLU.
    f = jnp.maximum(z * scale_ref[...] + bias_ref[...], 0.0)   # (Cout, P)

    # ChannelAttention: global avg-pool + max-pool over spatial (lane axis),
    # batched through the shared MLP as a single (Cout, 2) operand.
    avg = jnp.mean(f, axis=1, keepdims=True)             # (Cout, 1)
    mx = jnp.max(f, axis=1, keepdims=True)               # (Cout, 1)
    pooled = jnp.concatenate([avg, mx], axis=1)          # (Cout, 2)

    h = jnp.maximum(
        jnp.dot(fc1_ref[...], pooled, preferred_element_type=jnp.float32), 0.0)
    o = jnp.dot(fc2_ref[...], h, preferred_element_type=jnp.float32)  # (Cout, 2)
    att = jax.nn.sigmoid(jnp.sum(o, axis=1, keepdims=True))           # (Cout, 1)

    # fuse_fea + fuse_fea * ca(fuse_fea); lane-dense store (P % 128 == 0).
    out_ref[0] = (f * (1.0 + att)).astype(out_ref.dtype)


def feature_fusion(x, y, params):
    """x, y: NCHW float32 tensors (PyTorch layout). Returns NCHW."""
    w1, bn_scale, bn_bias, fc1, fc2 = params
    N, Cx, H, W = x.shape
    Cy = y.shape[1]
    Cout = w1.shape[0]
    P = H * W

    # Free, contiguous reshapes (no transpose): NCHW -> (N, C, P).
    xf = x.reshape(N, Cx, P)
    yf = y.reshape(N, Cy, P)

    itemsize = 4
    cost = pl.CostEstimate(
        flops=2 * N * P * (Cx + Cy) * Cout + 4 * N * Cout * (Cout // 16 + 1),
        transcendentals=N * Cout,
        bytes_accessed=itemsize * (x.size + y.size + N * Cout * P
                                   + w1.size + bn_scale.size + bn_bias.size
                                   + fc1.size + fc2.size),
    )

    out = pl.pallas_call(
        ffm_kernel,
        out_shape=jax.ShapeDtypeStruct((N, Cout, P), x.dtype),
        grid_spec=pltpu.PrefetchScalarGridSpec(
            num_scalar_prefetch=0,
            grid=(N,),
            in_specs=[
                pl.BlockSpec((1, Cx, P), lambda b: (b, 0, 0)),
                pl.BlockSpec((1, Cy, P), lambda b: (b, 0, 0)),
                pl.BlockSpec(w1.shape, lambda b: (0, 0)),
                pl.BlockSpec(bn_scale.shape, lambda b: (0, 0)),
                pl.BlockSpec(bn_bias.shape, lambda b: (0, 0)),
                pl.BlockSpec(fc1.shape, lambda b: (0, 0)),
                pl.BlockSpec(fc2.shape, lambda b: (0, 0)),
            ],
            out_specs=pl.BlockSpec((1, Cout, P), lambda b: (b, 0, 0)),
        ),
        compiler_params=pltpu.CompilerParams(
            dimension_semantics=("parallel",)),
        cost_estimate=cost,
    )(xf, yf, w1, bn_scale, bn_bias, fc1, fc2)

    # Free reshape back to NCHW.
    return out.reshape(N, Cout, H, W)


def reference(x, y, params):
    """Pure-JAX reference matching the PyTorch forward (inference-mode BN)."""
    w1, scale, bias, fc1, fc2 = params
    xy = jnp.concatenate([x, y], axis=1)                        # (N, Cin, H, W)
    z = jnp.einsum('oc,nchw->nohw', w1, xy,
                   precision=jax.lax.Precision.HIGHEST)
    z = z * scale[:, 0][None, :, None, None] + bias[:, 0][None, :, None, None]
    f = jnp.maximum(z, 0.0)
    avg = jnp.mean(f, axis=(2, 3))                              # (N, Cout)
    mx = jnp.max(f, axis=(2, 3))

    def mlp(v):
        h = jnp.maximum(
            jnp.dot(v, fc1.T, precision=jax.lax.Precision.HIGHEST), 0.0)
        return jnp.dot(h, fc2.T, precision=jax.lax.Precision.HIGHEST)

    att = jax.nn.sigmoid(mlp(avg) + mlp(mx))
    return f + f * att[:, :, None, None]


if __name__ == "__main__":
    # Small shapes consistent with the module: out_chan = 64, in_chan = 2*64,
    # ratio = 16 -> hidden = 4, batch = 2, spatial = 16x16 (P = 256, lane-dense).
    N, C, H, W = 2, 64, 16, 16
    Cout = C
    Chid = Cout // 16
    in_chan = 2 * C

    key = jax.random.PRNGKey(0)
    k = jax.random.split(key, 8)

    x = jax.random.normal(k[0], (N, C, H, W), jnp.float32)
    y = jax.random.normal(k[1], (N, C, H, W), jnp.float32)

    # Conv 1x1 weight in PyTorch layout (Cout, Cin); kaiming_normal-like std.
    std_conv = 1.0 / jnp.sqrt(jnp.float32(in_chan))
    w1 = jax.random.normal(k[2], (Cout, in_chan), jnp.float32) * std_conv

    # BatchNorm (inference): fold gamma/beta/running stats into scale & bias,
    # stored as (Cout, 1) for channels-first (sublane) broadcast in the kernel.
    gamma = 1.0 + 0.1 * jax.random.normal(k[4], (Cout,), jnp.float32)
    beta = 0.1 * jax.random.normal(k[5], (Cout,), jnp.float32)
    run_mean = jnp.zeros((Cout,), jnp.float32)
    run_var = jnp.ones((Cout,), jnp.float32)
    eps = 1e-5
    inv_std = gamma / jnp.sqrt(run_var + eps)
    bn_scale = inv_std.reshape(Cout, 1)
    bn_bias = (beta - run_mean * inv_std).reshape(Cout, 1)

    # ChannelAttention shared MLP, PyTorch 1x1-conv layout (out, in).
    fc1 = jax.random.normal(k[6], (Chid, Cout), jnp.float32) * (1.0 / jnp.sqrt(Cout))
    fc2 = jax.random.normal(k[7], (Cout, Chid), jnp.float32) * (1.0 / jnp.sqrt(Chid))

    params = (w1, bn_scale, bn_bias, fc1, fc2)

    out = feature_fusion(x, y, params)
    out = jax.block_until_ready(out)

    ref = reference(x, y, params)
    assert out.shape == (N, Cout, H, W)
    assert jnp.allclose(out, ref, atol=2e-4, rtol=2e-4)

    print("KERNEL_OK")
</pallas_src>

<mosaic_0001>
module attributes {stable_mosaic.version = 11 : i64} {
  func.func @ffm_kernel(%arg0: i32, %arg1: memref<1x64x256xf32, #tpu.memory_space<vmem>>, %arg2: memref<1x64x256xf32, #tpu.memory_space<vmem>>, %arg3: memref<64x128xf32, #tpu.memory_space<vmem>>, %arg4: memref<64x1xf32, #tpu.memory_space<vmem>>, %arg5: memref<64x1xf32, #tpu.memory_space<vmem>>, %arg6: memref<4x64xf32, #tpu.memory_space<vmem>>, %arg7: memref<64x4xf32, #tpu.memory_space<vmem>>, %arg8: memref<1x64x256xf32, #tpu.memory_space<vmem>>) attributes {dimension_semantics = [#tpu.dimension_semantics<parallel>], iteration_bounds = array<i64: 2>, scalar_prefetch = 0 : i64, scratch_operands = 0 : i64, tpu.core_type = #tpu.core_type<tc>, window_params = [{transform_indices = @transform_0, window_bounds = array<i64: 1, 64, 256>}, {transform_indices = @transform_1, window_bounds = array<i64: 1, 64, 256>}, {pipeline_mode = #tpu.pipeline_mode<synchronous>, transform_indices = @transform_2, window_bounds = array<i64: 64, 128>}, {pipeline_mode = #tpu.pipeline_mode<synchronous>, transform_indices = @transform_3, window_bounds = array<i64: 64, 1>}, {pipeline_mode = #tpu.pipeline_mode<synchronous>, transform_indices = @transform_4, window_bounds = array<i64: 64, 1>}, {pipeline_mode = #tpu.pipeline_mode<synchronous>, transform_indices = @transform_5, window_bounds = array<i64: 4, 64>}, {pipeline_mode = #tpu.pipeline_mode<synchronous>, transform_indices = @transform_6, window_bounds = array<i64: 64, 4>}, {transform_indices = @transform_7, window_bounds = array<i64: 1, 64, 256>}]} {
    %c0 = arith.constant 0 : index
    %c0_0 = arith.constant 0 : index
    %c0_1 = arith.constant 0 : index
    %0 = vector.load %arg1[%c0, %c0_0, %c0_1] : memref<1x64x256xf32, #tpu.memory_space<vmem>>, vector<1x64x256xf32>
    %1 = vector.shape_cast %0 : vector<1x64x256xf32> to vector<64x256xf32>
    %c0_2 = arith.constant 0 : index
    %c0_3 = arith.constant 0 : index
    %c0_4 = arith.constant 0 : index
    %2 = vector.load %arg2[%c0_2, %c0_3, %c0_4] : memref<1x64x256xf32, #tpu.memory_space<vmem>>, vector<1x64x256xf32>
    %3 = vector.shape_cast %2 : vector<1x64x256xf32> to vector<64x256xf32>
    %4 = tpu.concatenate %1, %3 in 0 : vector<64x256xf32>, vector<64x256xf32> -> vector<128x256xf32>
    %c0_5 = arith.constant 0 : index
    %c0_6 = arith.constant 0 : index
    %5 = vector.load %arg3[%c0_5, %c0_6] : memref<64x128xf32, #tpu.memory_space<vmem>>, vector<64x128xf32>
    %cst = arith.constant dense<0.000000e+00> : vector<64x256xf32>
    %6 = tpu.matmul %5, %4, %cst {dimension_numbers = #tpu.dot_dimension_numbers<[1], [0], [0], [1], [0, 0, 1, 1], [], []>} : vector<64x128xf32>, vector<128x256xf32>, vector<64x256xf32> -> vector<64x256xf32>
    %c0_7 = arith.constant 0 : index
    %c0_8 = arith.constant 0 : index
    %7 = vector.load %arg4[%c0_7, %c0_8] : memref<64x1xf32, #tpu.memory_space<vmem>>, vector<64x1xf32>
    %8 = vector.broadcast %7 : vector<64x1xf32> to vector<64x256xf32>
    %9 = arith.mulf %6, %8 : vector<64x256xf32>
    %c0_9 = arith.constant 0 : index
    %c0_10 = arith.constant 0 : index
    %10 = vector.load %arg5[%c0_9, %c0_10] : memref<64x1xf32, #tpu.memory_space<vmem>>, vector<64x1xf32>
    %11 = vector.broadcast %10 : vector<64x1xf32> to vector<64x256xf32>
    %12 = arith.addf %9, %11 : vector<64x256xf32>
    %cst_11 = arith.constant 0.000000e+00 : f32
    %13 = vector.broadcast %cst_11 : f32 to vector<64x256xf32>
    %14 = arith.maximumf %12, %13 : vector<64x256xf32>
    %cst_12 = arith.constant dense<0.000000e+00> : vector<64xf32>
    %15 = vector.multi_reduction <add>, %14, %cst_12 [1] : vector<64x256xf32> to vector<64xf32>
    %16 = vector.shape_cast %15 : vector<64xf32> to vector<64x1xf32>
    %cst_13 = arith.constant 2.560000e+02 : f32
    %17 = vector.broadcast %cst_13 : f32 to vector<64x1xf32>
    %18 = arith.divf %16, %17 : vector<64x1xf32>
    %cst_14 = arith.constant dense<0xFF800000> : vector<64xf32>
    %19 = vector.multi_reduction <maximumf>, %14, %cst_14 [1] : vector<64x256xf32> to vector<64xf32>
    %20 = vector.shape_cast %19 : vector<64xf32> to vector<64x1xf32>
    %21 = tpu.concatenate %18, %20 in 1 : vector<64x1xf32>, vector<64x1xf32> -> vector<64x2xf32>
    %c0_15 = arith.constant 0 : index
    %c0_16 = arith.constant 0 : index
    %22 = vector.load %arg6[%c0_15, %c0_16] : memref<4x64xf32, #tpu.memory_space<vmem>>, vector<4x64xf32>
    %cst_17 = arith.constant dense<0.000000e+00> : vector<4x2xf32>
    %23 = tpu.matmul %22, %21, %cst_17 {dimension_numbers = #tpu.dot_dimension_numbers<[1], [0], [0], [1], [0, 0, 1, 1], [], []>} : vector<4x64xf32>, vector<64x2xf32>, vector<4x2xf32> -> vector<4x2xf32>
    %cst_18 = arith.constant 0.000000e+00 : f32
    %24 = vector.broadcast %cst_18 : f32 to vector<4x2xf32>
    %25 = arith.maximumf %23, %24 : vector<4x2xf32>
    %c0_19 = arith.constant 0 : index
    %c0_20 = arith.constant 0 : index
    %26 = vector.load %arg7[%c0_19, %c0_20] : memref<64x4xf32, #tpu.memory_space<vmem>>, vector<64x4xf32>
    %cst_21 = arith.constant dense<0.000000e+00> : vector<64x2xf32>
    %27 = tpu.matmul %26, %25, %cst_21 {dimension_numbers = #tpu.dot_dimension_numbers<[1], [0], [0], [1], [0, 0, 1, 1], [], []>} : vector<64x4xf32>, vector<4x2xf32>, vector<64x2xf32> -> vector<64x2xf32>
    %cst_22 = arith.constant dense<0.000000e+00> : vector<64xf32>
    %28 = vector.multi_reduction <add>, %27, %cst_22 [1] : vector<64x2xf32> to vector<64xf32>
    %29 = vector.shape_cast %28 : vector<64xf32> to vector<64x1xf32>
    %30 = arith.negf %29 : vector<64x1xf32>
    %31 = math.exp %30 : vector<64x1xf32>
    %cst_23 = arith.constant 1.000000e+00 : f32
    %32 = vector.broadcast %cst_23 : f32 to vector<64x1xf32>
    %33 = arith.addf %32, %31 : vector<64x1xf32>
    %34 = arith.divf %32, %33 : vector<64x1xf32>
    %cst_24 = arith.constant 1.000000e+00 : f32
    %35 = vector.broadcast %cst_24 : f32 to vector<64x1xf32>
    %36 = arith.addf %35, %34 : vector<64x1xf32>
    %37 = vector.broadcast %36 : vector<64x1xf32> to vector<64x256xf32>
    %38 = arith.mulf %14, %37 : vector<64x256xf32>
    %c0_25 = arith.constant 0 : index
    %c0_26 = arith.constant 0 : index
    %c0_27 = arith.constant 0 : index
    %39 = vector.load %arg8[%c0_25, %c0_26, %c0_27] : memref<1x64x256xf32, #tpu.memory_space<vmem>>, vector<1x64x256xf32>
    %40 = vector.shape_cast %39 : vector<1x64x256xf32> to vector<64x256xf32>
    %41 = vector.shape_cast %38 : vector<64x256xf32> to vector<1x64x256xf32>
    tpu.vector_store %arg8[%c0_25, %c0_26, %c0_27], %41 {strides = array<i32>} : memref<1x64x256xf32, #tpu.memory_space<vmem>>, vector<1x64x256xf32>,
    return
  }
  func.func @transform_0(%arg0: i32) -> (i32, i32, i32) {
    %c0_i32 = arith.constant 0 : i32
    %c0_i32_0 = arith.constant 0 : i32
    %c0_i32_1 = arith.constant 0 : i32
    return %arg0, %c0_i32, %c0_i32_0 : i32, i32, i32
  }
  func.func @transform_1(%arg0: i32) -> (i32, i32, i32) {
    %c0_i32 = arith.constant 0 : i32
    %c0_i32_0 = arith.constant 0 : i32
    %c0_i32_1 = arith.constant 0 : i32
    return %arg0, %c0_i32, %c0_i32_0 : i32, i32, i32
  }
  func.func @transform_2(%arg0: i32) -> (i32, i32) {
    %c0_i32 = arith.constant 0 : i32
    %c0_i32_0 = arith.constant 0 : i32
    %c0_i32_1 = arith.constant 0 : i32
    return %c0_i32, %c0_i32_0 : i32, i32
  }
  func.func @transform_3(%arg0: i32) -> (i32, i32) {
    %c0_i32 = arith.constant 0 : i32
    %c0_i32_0 = arith.constant 0 : i32
    %c0_i32_1 = arith.constant 0 : i32
    return %c0_i32, %c0_i32_0 : i32, i32
  }
  func.func @transform_4(%arg0: i32) -> (i32, i32) {
    %c0_i32 = arith.constant 0 : i32
    %c0_i32_0 = arith.constant 0 : i32
    %c0_i32_1 = arith.constant 0 : i32
    return %c0_i32, %c0_i32_0 : i32, i32
  }
  func.func @transform_5(%arg0: i32) -> (i32, i32) {
    %c0_i32 = arith.constant 0 : i32
    %c0_i32_0 = arith.constant 0 : i32
    %c0_i32_1 = arith.constant 0 : i32
    return %c0_i32, %c0_i32_0 : i32, i32
  }
  func.func @transform_6(%arg0: i32) -> (i32, i32) {
    %c0_i32 = arith.constant 0 : i32
    %c0_i32_0 = arith.constant 0 : i32
    %c0_i32_1 = arith.constant 0 : i32
    return %c0_i32, %c0_i32_0 : i32, i32
  }
  func.func @transform_7(%arg0: i32) -> (i32, i32, i32) {
    %c0_i32 = arith.constant 0 : i32
    %c0_i32_0 = arith.constant 0 : i32
    %c0_i32_1 = arith.constant 0 : i32
    return %arg0, %c0_i32, %c0_i32_0 : i32, i32, i32
  }
}

</mosaic_0001>

<llo_original>
// kernel: tpu_custom_call.1
$region0: #{tpu_custom_call.1}
  #allocation0 [shape = 'u32[]', space=smem, size = 0x4, offset = 0x4, fixed_abs, tag = 'smem constant byte address 0x4 - core index']
  #allocation1 [shape = 'u32[144,128]{1,0:T(1,128)}', space=vmem, size = 0x12000, scoped, tag = 'internal scratch']
  %s0 = inlined_call_operand.hbm [shape: f32[2,64,256], index: 0, kind: input, shape index: {}]
  %s1 = inlined_call_operand.hbm [shape: f32[2,64,256], index: 1, kind: input, shape index: {}]
  %s2 = inlined_call_operand.vmem [shape: f32[64,128], index: 2, kind: input, shape index: {}]
  %s3 = inlined_call_operand.vmem [shape: f32[64,1], index: 3, kind: input, shape index: {}]
  %s4 = inlined_call_operand.vmem [shape: f32[64,1], index: 4, kind: input, shape index: {}]
  %s5 = inlined_call_operand.vmem [shape: f32[4,64], index: 5, kind: input, shape index: {}]
  %s6 = inlined_call_operand.vmem [shape: f32[64,4], index: 6, kind: input, shape index: {}]
  %s7 = inlined_call_operand.hbm [shape: f32[2,64,256], index: 7, kind: output, shape index: {}]
  %s8 = sld [smem:[#allocation0]]
  $region69: #{tpu_custom_call.1} parent=0
    _
  %s10 = ssub.s32 1, %s8
  %s11 = scalar_select 0, %s10, %s8
  $region1: #{tpu_custom_call.1} parent=0
    #allocation2 [shape = 'u8[131072]{0}', space=vmem, size = 0x20000, scoped, tag = 'input window, operand 0']
    #allocation3 [shape = 's32[2]{0}', space=sflag, size = 0x8, scoped, tag = 'scoped memory for tpu_custom_call.1']
    #allocation4 [shape = 's32[2]{0}', space=sflag, size = 0x8, scoped, tag = 'scoped memory for tpu_custom_call.1']
    #allocation5 [shape = 'u8[131072]{0}', space=vmem, size = 0x20000, scoped, tag = 'input window, operand 1']
    #allocation6 [shape = 's32[2]{0}', space=sflag, size = 0x8, scoped, tag = 'scoped memory for tpu_custom_call.1']
    #allocation7 [shape = 'u8[131072]{0}', space=vmem, size = 0x20000, scoped, tag = 'output window, operand 0']
    %12 = vsyncpa [#allocation3], 0
    %s13 = scalar_lea.sflag [#allocation3], 1
    %14 = vsyncpa %s13, 0
    %15 = vsyncpa [#allocation6], 0
    %s16 = scalar_lea.sflag [#allocation6], 1
    %17 = vsyncpa %s16, 0
    %18 = vsyncpa [#allocation4], 0
    %s19 = scalar_lea.sflag [#allocation4], 1
    %20 = vsyncpa %s19, 0
    loop: start=0, step=1, limit=4
    $region2: #{tpu_custom_call.1} parent=1 // loop_pre_header
      _
    $region3: #{tpu_custom_call.1} parent=1 // loop_header
      %s22 = sphi 0, %s26
      %p23 = scmp.ge.s32.totalorder %s22, 4
      %s32 = sphi 0, %s34
      %s35 = sphi 0, %s32
      %s36 = sphi 0, %s35
      %s52 = sphi 0, %s36
      %s58 = sphi 0, %s60
      %s61 = sphi 0, %s58
      %s62 = sphi 0, %s61
      %s78 = sphi 0, %s62
      %s82 = sphi 0, %s82
      %s84 = sphi 0, %s82
      %s85 = sphi 0, %s84
      %s99 = sphi 0, %s85
      %s103 = sphi 0, %s103
      %s105 = sphi 0, %s103
      %s106 = sphi 0, %s105
      %s120 = sphi 0, %s106
      %s124 = sphi 0, %s124
      %s126 = sphi 0, %s124
      %s127 = sphi 0, %s126
      %s141 = sphi 0, %s127
      %s145 = sphi 0, %s145
      %s147 = sphi 0, %s145
      %s148 = sphi 0, %s147
      %s162 = sphi 0, %s148
      %s166 = sphi 0, %s166
      %s168 = sphi 0, %s166
      %s169 = sphi 0, %s168
      %s183 = sphi 0, %s169
      %s189 = sphi 0, %s191
      %s192 = sphi 0, %s189
      %s193 = sphi 0, %s192
      %s209 = sphi 0, %s193
    $region4: #{tpu_custom_call.1} parent=1 // loop_header_branch
      %25 = sbr.rel (%p23) target = $region8
    $region5: #{tpu_custom_call.1} parent=1 // loop_body
      %s27 = ssub.s32 %s22, 1
      %s28 = ssub.s32 %s22, 2
      %s29 = sadd.s32 %s22, 1
      %s30 = ssub.s32 %s22, %s29
      %p31 = scmp.eq.s32.totalorder %s30, 0
      %s33 = sadd.s32 %s32, 1
      %s34 = scalar_select %p31, %s32, %s33
      %p37 = pneg %p31
      %p38 = scmp.eq.s32.totalorder %s22, 1
      %p39 = por %p37, %p38
      %p40 = scmp.ne.s32.totalorder %s32, %s35
      %p41 = scmp.eq.s32.totalorder %s22, 0
      %p42 = por %p40, %p41
      %p43 = scmp.ne.s32.totalorder %s32, %s35
      %p44 = scmp.eq.s32.totalorder %s27, 1
      %p45 = por %p43, %p44
      %p46 = scmp.ne.s32.totalorder %s35, %s36
      %p47 = scmp.eq.s32.totalorder %s27, 0
      %p48 = por %p46, %p47
      %p49 = scmp.ne.s32.totalorder %s35, %s36
      %p50 = scmp.eq.s32.totalorder %s28, 1
      %p51 = por %p49, %p50
      %p53 = scmp.ne.s32.totalorder %s36, %s52
      %p54 = scmp.eq.s32.totalorder %s28, 0
      %p55 = por %p53, %p54
      %s56 = ssub.s32 %s22, %s29
      %p57 = scmp.eq.s32.totalorder %s56, 0
      %s59 = sadd.s32 %s58, 1
      %s60 = scalar_select %p57, %s58, %s59
      %p63 = pneg %p57
      %p64 = scmp.eq.s32.totalorder %s22, 1
      %p65 = por %p63, %p64
      %p66 = scmp.ne.s32.totalorder %s58, %s61
      %p67 = scmp.eq.s32.totalorder %s22, 0
      %p68 = por %p66, %p67
      %p69 = scmp.ne.s32.totalorder %s58, %s61
      %p70 = scmp.eq.s32.totalorder %s27, 1
      %p71 = por %p69, %p70
      %p72 = scmp.ne.s32.totalorder %s61, %s62
      %p73 = scmp.eq.s32.totalorder %s27, 0
      %p74 = por %p72, %p73
      %p75 = scmp.ne.s32.totalorder %s61, %s62
      %p76 = scmp.eq.s32.totalorder %s28, 1
      %p77 = por %p75, %p76
      %p79 = scmp.ne.s32.totalorder %s62, %s78
      %p80 = scmp.eq.s32.totalorder %s28, 0
      %p81 = por %p79, %p80
      %s83 = sadd.s32 %s82, 1
      %p86 = scmp.eq.s32.totalorder %s22, 1
      %p87 = scmp.ne.s32.totalorder %s82, %s84
      %p88 = scmp.eq.s32.totalorder %s22, 0
      %p89 = por %p87, %p88
      %p90 = scmp.ne.s32.totalorder %s82, %s84
      %p91 = scmp.eq.s32.totalorder %s27, 1
      %p92 = por %p90, %p91
      %p93 = scmp.ne.s32.totalorder %s84, %s85
      %p94 = scmp.eq.s32.totalorder %s27, 0
      %p95 = por %p93, %p94
      %p96 = scmp.ne.s32.totalorder %s84, %s85
      %p97 = scmp.eq.s32.totalorder %s28, 1
      %p98 = por %p96, %p97
      %p100 = scmp.ne.s32.totalorder %s85, %s99
      %p101 = scmp.eq.s32.totalorder %s28, 0
      %p102 = por %p100, %p101
      %s104 = sadd.s32 %s103, 1
      %p107 = scmp.eq.s32.totalorder %s22, 1
      %p108 = scmp.ne.s32.totalorder %s103, %s105
      %p109 = scmp.eq.s32.totalorder %s22, 0
      %p110 = por %p108, %p109
      %p111 = scmp.ne.s32.totalorder %s103, %s105
      %p112 = scmp.eq.s32.totalorder %s27, 1
      %p113 = por %p111, %p112
      %p114 = scmp.ne.s32.totalorder %s105, %s106
      %p115 = scmp.eq.s32.totalorder %s27, 0
      %p116 = por %p114, %p115
      %p117 = scmp.ne.s32.totalorder %s105, %s106
      %p118 = scmp.eq.s32.totalorder %s28, 1
      %p119 = por %p117, %p118
      %p121 = scmp.ne.s32.totalorder %s106, %s120
      %p122 = scmp.eq.s32.totalorder %s28, 0
      %p123 = por %p121, %p122
      %s125 = sadd.s32 %s124, 1
      %p128 = scmp.eq.s32.totalorder %s22, 1
      %p129 = scmp.ne.s32.totalorder %s124, %s126
      %p130 = scmp.eq.s32.totalorder %s22, 0
      %p131 = por %p129, %p130
      %p132 = scmp.ne.s32.totalorder %s124, %s126
      %p133 = scmp.eq.s32.totalorder %s27, 1
      %p134 = por %p132, %p133
      %p135 = scmp.ne.s32.totalorder %s126, %s127
      %p136 = scmp.eq.s32.totalorder %s27, 0
      %p137 = por %p135, %p136
      %p138 = scmp.ne.s32.totalorder %s126, %s127
      %p139 = scmp.eq.s32.totalorder %s28, 1
      %p140 = por %p138, %p139
      %p142 = scmp.ne.s32.totalorder %s127, %s141
      %p143 = scmp.eq.s32.totalorder %s28, 0
      %p144 = por %p142, %p143
      %s146 = sadd.s32 %s145, 1
      %p149 = scmp.eq.s32.totalorder %s22, 1
      %p150 = scmp.ne.s32.totalorder %s145, %s147
      %p151 = scmp.eq.s32.totalorder %s22, 0
      %p152 = por %p150, %p151
      %p153 = scmp.ne.s32.totalorder %s145, %s147
      %p154 = scmp.eq.s32.totalorder %s27, 1
      %p155 = por %p153, %p154
      %p156 = scmp.ne.s32.totalorder %s147, %s148
      %p157 = scmp.eq.s32.totalorder %s27, 0
      %p158 = por %p156, %p157
      %p159 = scmp.ne.s32.totalorder %s147, %s148
      %p160 = scmp.eq.s32.totalorder %s28, 1
      %p161 = por %p159, %p160
      %p163 = scmp.ne.s32.totalorder %s148, %s162
      %p164 = scmp.eq.s32.totalorder %s28, 0
      %p165 = por %p163, %p164
      %s167 = sadd.s32 %s166, 1
      %p170 = scmp.eq.s32.totalorder %s22, 1
      %p171 = scmp.ne.s32.totalorder %s166, %s168
      %p172 = scmp.eq.s32.totalorder %s22, 0
      %p173 = por %p171, %p172
      %p174 = scmp.ne.s32.totalorder %s166, %s168
      %p175 = scmp.eq.s32.totalorder %s27, 1
      %p176 = por %p174, %p175
      %p177 = scmp.ne.s32.totalorder %s168, %s169
      %p178 = scmp.eq.s32.totalorder %s27, 0
      %p179 = por %p177, %p178
      %p180 = scmp.ne.s32.totalorder %s168, %s169
      %p181 = scmp.eq.s32.totalorder %s28, 1
      %p182 = por %p180, %p181
      %p184 = scmp.ne.s32.totalorder %s169, %s183
      %p185 = scmp.eq.s32.totalorder %s28, 0
      %p186 = por %p184, %p185
      %s187 = ssub.s32 %s22, %s29
      %p188 = scmp.eq.s32.totalorder %s187, 0
      %s190 = sadd.s32 %s189, 1
      %s191 = scalar_select %p188, %s189, %s190
      %p194 = pneg %p188
      %p195 = scmp.eq.s32.totalorder %s22, 1
      %p196 = por %p194, %p195
      %p197 = scmp.ne.s32.totalorder %s189, %s192
      %p198 = scmp.eq.s32.totalorder %s22, 0
      %p199 = por %p197, %p198
      %p200 = scmp.ne.s32.totalorder %s189, %s192
      %p201 = scmp.eq.s32.totalorder %s27, 1
      %p202 = por %p200, %p201
      %p203 = scmp.ne.s32.totalorder %s192, %s193
      %p204 = scmp.eq.s32.totalorder %s27, 0
      %p205 = por %p203, %p204
      %p206 = scmp.ne.s32.totalorder %s192, %s193
      %p207 = scmp.eq.s32.totalorder %s28, 1
      %p208 = por %p206, %p207
      %p210 = scmp.ne.s32.totalorder %s193, %s209
      %p211 = scmp.eq.s32.totalorder %s28, 0
      %p212 = por %p210, %p211
      %p213 = scmp.le.s32.totalorder 1, %s22
      %p214 = scmp.lt.s32.totalorder %s22, 3
      %p215 = pnand %p213, %p214
      %p216 = pneg %p215
      // Predicated region
      $region9: #{tpu_custom_call.1} parent=5 // pred_check
        _
      $region10: #{tpu_custom_call.1} parent=5 // pred_check_branch
        %218 = sbr.rel (%p215) target = $region12
      $region11: #{tpu_custom_call.1} parent=5 // pred_region
        %s219 = ssub.s32 %s22, 1
        // Predicated region
        $region13: #{tpu_custom_call.1} parent=11 // pred_check
          %p220 = pneg %p95
        $region14: #{tpu_custom_call.1} parent=11 // pred_check_branch
          %222 = sbr.rel (%p220) target = $region16
        $region15: #{tpu_custom_call.1} parent=11 // pred_region
          _
        $region16: #{tpu_custom_call.1} parent=11 // pred_fallthru
          _
        // Predicated region
        $region17: #{tpu_custom_call.1} parent=11 // pred_check
          %p223 = pneg %p116
        $region18: #{tpu_custom_call.1} parent=11 // pred_check_branch
          %225 = sbr.rel (%p223) target = $region20
        $region19: #{tpu_custom_call.1} parent=11 // pred_region
          _
        $region20: #{tpu_custom_call.1} parent=11 // pred_fallthru
          _
        // Predicated region
        $region21: #{tpu_custom_call.1} parent=11 // pred_check
          %p226 = pneg %p137
        $region22: #{tpu_custom_call.1} parent=11 // pred_check_branch
          %228 = sbr.rel (%p226) target = $region24
        $region23: #{tpu_custom_call.1} parent=11 // pred_region
          _
        $region24: #{tpu_custom_call.1} parent=11 // pred_fallthru
          _
        // Predicated region
        $region25: #{tpu_custom_call.1} parent=11 // pred_check
          %p229 = pneg %p158
        $region26: #{tpu_custom_call.1} parent=11 // pred_check_branch
          %231 = sbr.rel (%p229) target = $region28
        $region27: #{tpu_custom_call.1} parent=11 // pred_region
          _
        $region28: #{tpu_custom_call.1} parent=11 // pred_fallthru
          _
        // Predicated region
        $region29: #{tpu_custom_call.1} parent=11 // pred_check
          %p232 = pneg %p179
        $region30: #{tpu_custom_call.1} parent=11 // pred_check_branch
          %234 = sbr.rel (%p232) target = $region32
        $region31: #{tpu_custom_call.1} parent=11 // pred_region
          _
        $region32: #{tpu_custom_call.1} parent=11 // pred_fallthru
          _
      $region12: #{tpu_custom_call.1} parent=5 // pred_fallthru
        _
      %p235 = scmp.lt.s32.totalorder %s22, 2
      // Predicated region
      $region33: #{tpu_custom_call.1} parent=5 // pred_check
        %p236 = pneg %p235
      $region34: #{tpu_custom_call.1} parent=5 // pred_check_branch
        %238 = sbr.rel (%p236) target = $region36
      $region35: #{tpu_custom_call.1} parent=5 // pred_region
        // Predicated region
        $region37: #{tpu_custom_call.1} parent=35 // pred_check
          %p239 = pneg %p42
        $region38: #{tpu_custom_call.1} parent=35 // pred_check_branch
          %241 = sbr.rel (%p239) target = $region40
        $region39: #{tpu_custom_call.1} parent=35 // pred_region
          %s242 = sand.u32 %s32, 1
          %s243 = scalar_lea.sflag [#allocation3], %s242
          %s244 = sand.u32 %s32, 1
          %s245 = smul.addr %s244, 128
          %s246 = scalar_lea.vmem [#allocation2], %s245
          %s248 = ssub.s32 2048, 2048
          %249 = vsyncadd %s243, %s248
          %s250 = smul.addr %s22, 16
          %s251 = smul.addr %s250, 128
          %s252 = scalar_lea.hbm %s0, %s251
          %s253 = sshll.u32 %s246, 4
          %s254 = int_to_ptr.vmem [resolvable:$true] %s253
          %259 = dma.hbm_to_vmem [thread:$0]  %s252, 2048, %s254, %s243, 256, 256, 16
        $region40: #{tpu_custom_call.1} parent=35 // pred_fallthru
          _
        // Predicated region
        $region41: #{tpu_custom_call.1} parent=35 // pred_check
          %p260 = pneg %p68
        $region42: #{tpu_custom_call.1} parent=35 // pred_check_branch
          %262 = sbr.rel (%p260) target = $region44
        $region43: #{tpu_custom_call.1} parent=35 // pred_region
          %s263 = sand.u32 %s58, 1
          %s264 = scalar_lea.sflag [#allocation6], %s263
          %s265 = sand.u32 %s58, 1
          %s266 = smul.addr %s265, 128
          %s267 = scalar_lea.vmem [#allocation5], %s266
          %s269 = ssub.s32 2048, 2048
          %270 = vsyncadd %s264, %s269
          %s271 = smul.addr %s22, 16
          %s272 = smul.addr %s271, 128
          %s273 = scalar_lea.hbm %s1, %s272
          %s274 = sshll.u32 %s267, 4
          %s275 = int_to_ptr.vmem [resolvable:$true] %s274
          %280 = dma.hbm_to_vmem [thread:$0]  %s273, 2048, %s275, %s264, 256, 256, 16
        $region44: #{tpu_custom_call.1} parent=35 // pred_fallthru
          _
      $region36: #{tpu_custom_call.1} parent=5 // pred_fallthru
        _
      %p281 = scmp.le.s32.totalorder 1, %s22
      %p282 = scmp.lt.s32.totalorder %s22, 3
      %p283 = pnand %p281, %p282
      %p284 = pneg %p283
      // Predicated region
      $region45: #{tpu_custom_call.1} parent=5 // pred_check
        _
      $region46: #{tpu_custom_call.1} parent=5 // pred_check_branch
        %286 = sbr.rel (%p283) target = $region48
      $region47: #{tpu_custom_call.1} parent=5 // pred_region
        %s287 = ssub.s32 %s22, 1
        %s288 = sand.u32 %s35, 1
        %s289 = scalar_lea.sflag [#allocation3], %s288
        %s290 = sand.u32 %s35, 1
        %s291 = smul.addr %s290, 128
        %s292 = scalar_lea.vmem [#allocation2], %s291
        // Predicated region
        $region49: #{tpu_custom_call.1} parent=47 // pred_check
          %p293 = pneg %p48
        $region50: #{tpu_custom_call.1} parent=47 // pred_check_branch
          %295 = sbr.rel (%p293) target = $region52
        $region51: #{tpu_custom_call.1} parent=47 // pred_region
          %296 = dma.done %s289, 2048
        $region52: #{tpu_custom_call.1} parent=47 // pred_fallthru
          _
        %s297 = sand.u32 %s61, 1
        %s298 = scalar_lea.sflag [#allocation6], %s297
        %s299 = sand.u32 %s61, 1
        %s300 = smul.addr %s299, 128
        %s301 = scalar_lea.vmem [#allocation5], %s300
        // Predicated region
        $region53: #{tpu_custom_call.1} parent=47 // pred_check
          %p302 = pneg %p74
        $region54: #{tpu_custom_call.1} parent=47 // pred_check_branch
          %304 = sbr.rel (%p302) target = $region56
        $region55: #{tpu_custom_call.1} parent=47 // pred_region
          %305 = dma.done %s298, 2048
        $region56: #{tpu_custom_call.1} parent=47 // pred_fallthru
          _
        %s306 = sand.u32 %s35, 1
        %s307 = scalar_lea.sflag [#allocation3], %s306
        %s308 = sand.u32 %s35, 1
        %s309 = smul.addr %s308, 128
        %s310 = scalar_lea.vmem [#allocation2], %s309
        %p311 = pneg %p48
        %p312 = pneg %p45
        %s313 = sand.u32 %s61, 1
        %s314 = scalar_lea.sflag [#allocation6], %s313
        %s315 = sand.u32 %s61, 1
        %s316 = smul.addr %s315, 128
        %s317 = scalar_lea.vmem [#allocation5], %s316
        %p318 = pneg %p74
        %p319 = pneg %p71
        %p320 = pneg %p95
        %p321 = pneg %p92
        %p322 = pneg %p116
        %p323 = pneg %p113
        %p324 = pneg %p137
        %p325 = pneg %p134
        %p326 = pneg %p158
        %p327 = pneg %p155
        %p328 = pneg %p179
        %p329 = pneg %p176
        %p330 = pneg %p205
        %p331 = pneg %p202
        %s332 = sand.u32 %s192, 1
        %s333 = scalar_lea.sflag [#allocation4], %s332
        %s334 = sand.u32 %s192, 1
        %s335 = smul.addr %s334, 128
        %s336 = scalar_lea.vmem [#allocation7], %s335
        %v337 = vld [vmem:[%s292] sm:$0xff]
        %v338 = vld [vmem:[%s292 + $0x8] sm:$0xff]
        %v339 = vld [vmem:[%s292 + $0x10] sm:$0xff]
        %v340 = vld [vmem:[%s292 + $0x18] sm:$0xff]
        %v341 = vld [vmem:[%s292 + $0x20] sm:$0xff]
        %v342 = vld [vmem:[%s292 + $0x28] sm:$0xff]
        %v343 = vld [vmem:[%s292 + $0x30] sm:$0xff]
        %v344 = vld [vmem:[%s292 + $0x38] sm:$0xff]
        %v345 = vld [vmem:[%s292 + $0x40] sm:$0xff]
        %v346 = vld [vmem:[%s292 + $0x48] sm:$0xff]
        %v347 = vld [vmem:[%s292 + $0x50] sm:$0xff]
        %v348 = vld [vmem:[%s292 + $0x58] sm:$0xff]
        %v349 = vld [vmem:[%s292 + $0x60] sm:$0xff]
        %v350 = vld [vmem:[%s292 + $0x68] sm:$0xff]
        %v351 = vld [vmem:[%s292 + $0x70] sm:$0xff]
        %v352 = vld [vmem:[%s292 + $0x78] sm:$0xff]
        %v353 = vld [vmem:[%s301] sm:$0xff]
        %v354 = vld [vmem:[%s301 + $0x8] sm:$0xff]
        %v355 = vld [vmem:[%s301 + $0x10] sm:$0xff]
        %v356 = vld [vmem:[%s301 + $0x18] sm:$0xff]
        %v357 = vld [vmem:[%s301 + $0x20] sm:$0xff]
        %v358 = vld [vmem:[%s301 + $0x28] sm:$0xff]
        %v359 = vld [vmem:[%s301 + $0x30] sm:$0xff]
        %v360 = vld [vmem:[%s301 + $0x38] sm:$0xff]
        %v361 = vld [vmem:[%s301 + $0x40] sm:$0xff]
        %v362 = vld [vmem:[%s301 + $0x48] sm:$0xff]
        %v363 = vld [vmem:[%s301 + $0x50] sm:$0xff]
        %v364 = vld [vmem:[%s301 + $0x58] sm:$0xff]
        %v365 = vld [vmem:[%s301 + $0x60] sm:$0xff]
        %v366 = vld [vmem:[%s301 + $0x68] sm:$0xff]
        %v367 = vld [vmem:[%s301 + $0x70] sm:$0xff]
        %v368 = vld [vmem:[%s301 + $0x78] sm:$0xff]
        %v369 = vld [vmem:[%s2] sm:$0xff]
        %v370 = vld [vmem:[%s2 + $0x8] sm:$0xff]
        %v371 = vld [vmem:[%s2 + $0x10] sm:$0xff]
        %v372 = vld [vmem:[%s2 + $0x18] sm:$0xff]
        %v373 = vld [vmem:[%s2 + $0x20] sm:$0xff]
        %v374 = vld [vmem:[%s2 + $0x28] sm:$0xff]
        %v375 = vld [vmem:[%s2 + $0x30] sm:$0xff]
        %v376 = vld [vmem:[%s2 + $0x38] sm:$0xff]
        %377 = vmatprep.subr.mxu0 %v338
        %378 = vmatpush1.msra.mxu0 %v337
        %379 = vmatprep.subr.mxu0 %v340
        %380 = vmatpush1.msra.mxu0 %v339
        %381 = vmatprep.subr.mxu0 %v342
        %382 = vmatpush1.msra.mxu0 %v341
        %383 = vmatprep.subr.mxu0 %v344
        %384 = vmatpush1.msra.mxu0 %v343
        %385 = vmatprep.subr.mxu0 %v346
        %386 = vmatpush1.msra.mxu0 %v345
        %387 = vmatprep.subr.mxu0 %v348
        %388 = vmatpush1.msra.mxu0 %v347
        %389 = vmatprep.subr.mxu0 %v350
        %390 = vmatpush1.msra.mxu0 %v349
        %391 = vmatprep.subr.mxu0 %v352
        %392 = vmatpush1.msra.mxu0 %v351
        %393 = vmatprep.subr.mxu0 %v354
        %394 = vmatpush1.msra.mxu0 %v353
        %395 = vmatprep.subr.mxu0 %v356
        %396 = vmatpush1.msra.mxu0 %v355
        %397 = vmatprep.subr.mxu0 %v358
        %398 = vmatpush1.msra.mxu0 %v357
        %399 = vmatprep.subr.mxu0 %v360
        %400 = vmatpush1.msra.mxu0 %v359
        %401 = vmatprep.subr.mxu0 %v362
        %402 = vmatpush1.msra.mxu0 %v361
        %403 = vmatprep.subr.mxu0 %v364
        %404 = vmatpush1.msra.mxu0 %v363
        %405 = vmatprep.subr.mxu0 %v366
        %406 = vmatpush1.msra.mxu0 %v365
        %407 = vmatprep.subr.mxu0 %v368
        %408 = vmatpush1.msra.mxu0 %v367
        %409 = vmatprep.subr.mxu0 0.0
        %410 = vmatpush1.msra.mxu0 0.0
        %411 = vmatprep.subr.mxu0 0.0
        %412 = vmatpush1.msra.mxu0 0.0
        %413 = vmatprep.subr.mxu0 0.0
        %414 = vmatpush1.msra.mxu0 0.0
        %415 = vmatprep.subr.mxu0 0.0
        %416 = vmatpush1.msra.mxu0 0.0
        %417 = vmatprep.subr.mxu0 0.0
        %418 = vmatpush1.msra.mxu0 0.0
        %419 = vmatprep.subr.mxu0 0.0
        %420 = vmatpush1.msra.mxu0 0.0
        %421 = vmatprep.subr.mxu0 0.0
        %422 = vmatpush1.msra.mxu0 0.0
        %423 = vmatprep.subr.mxu0 0.0
        %424 = vmatpush1.msra.mxu0 0.0
        %425 = vmatprep.subr.mxu0 0.0
        %426 = vmatpush1.msra.mxu0 0.0
        %427 = vmatprep.subr.mxu0 0.0
        %428 = vmatpush1.msra.mxu0 0.0
        %429 = vmatprep.subr.mxu0 0.0
        %430 = vmatpush1.msra.mxu0 0.0
        %431 = vmatprep.subr.mxu0 0.0
        %432 = vmatpush1.msra.mxu0 0.0
        %433 = vmatprep.subr.mxu0 0.0
        %434 = vmatpush1.msra.mxu0 0.0
        %435 = vmatprep.subr.mxu0 0.0
        %436 = vmatpush1.msra.mxu0 0.0
        %437 = vmatprep.subr.mxu0 0.0
        %438 = vmatpush1.msra.mxu0 0.0
        %439 = vmatprep.subr.mxu0 0.0
        %440 = vmatpush1.msra.mxu0 0.0
        %441 = vmatprep.mubr.f32.mxu0 0.0
        %442 = vmatmul.mubr.f32.gmra.mrb[0].mxu0 %v369
        %v443 = vpop.f32.mrb[0].mxu0
        %v444 = vadd.f32 0.0, %v443
        %v445 = vpop.f32.mrb[0].mxu0
        %v446 = vadd.f32 0.0, %v445
        %447 = vmatprep.mubr.f32.mxu0 0.0
        %448 = vmatmul.mubr.f32.gmra.mrb[0].mxu0 %v370
        %v449 = vpop.f32.mrb[0].mxu0
        %v450 = vadd.f32 0.0, %v449
        %v451 = vpop.f32.mrb[0].mxu0
        %v452 = vadd.f32 0.0, %v451
        %453 = vmatprep.mubr.f32.mxu0 0.0
        %454 = vmatmul.mubr.f32.gmra.mrb[0].mxu0 %v371
        %v455 = vpop.f32.mrb[0].mxu0
        %v456 = vadd.f32 0.0, %v455
        %v457 = vpop.f32.mrb[0].mxu0
        %v458 = vadd.f32 0.0, %v457
        %459 = vmatprep.mubr.f32.mxu0 0.0
        %460 = vmatmul.mubr.f32.gmra.mrb[0].mxu0 %v372
        %v461 = vpop.f32.mrb[0].mxu0
        %v462 = vadd.f32 0.0, %v461
        %v463 = vpop.f32.mrb[0].mxu0
        %v464 = vadd.f32 0.0, %v463
        %465 = vmatprep.mubr.f32.mxu0 0.0
        %466 = vmatmul.mubr.f32.gmra.mrb[0].mxu0 %v373
        %v467 = vpop.f32.mrb[0].mxu0
        %v468 = vadd.f32 0.0, %v467
        %v469 = vpop.f32.mrb[0].mxu0
        %v470 = vadd.f32 0.0, %v469
        %471 = vmatprep.mubr.f32.mxu0 0.0
        %472 = vmatmul.mubr.f32.gmra.mrb[0].mxu0 %v374
        %v473 = vpop.f32.mrb[0].mxu0
        %v474 = vadd.f32 0.0, %v473
        %v475 = vpop.f32.mrb[0].mxu0
        %v476 = vadd.f32 0.0, %v475
        %477 = vmatprep.mubr.f32.mxu0 0.0
        %478 = vmatmul.mubr.f32.gmra.mrb[0].mxu0 %v375
        %v479 = vpop.f32.mrb[0].mxu0
        %v480 = vadd.f32 0.0, %v479
        %v481 = vpop.f32.mrb[0].mxu0
        %v482 = vadd.f32 0.0, %v481
        %483 = vmatprep.mubr.f32.mxu0 0.0
        %484 = vmatmul.mubr.f32.gmra.mrb[0].mxu0 %v376
        %v485 = vpop.f32.mrb[0].mxu0
        %v486 = vadd.f32 0.0, %v485
        %v487 = vpop.f32.mrb[0].mxu0
        %v488 = vadd.f32 0.0, %v487
        %489 = vdwg.mxu0
        %v490 = vld [vmem:[%s3] sm:$0xff]
        %v491 = vld [vmem:[%s3 + $0x8] sm:$0xff]
        %v492 = vld [vmem:[%s3 + $0x10] sm:$0xff]
        %v493 = vld [vmem:[%s3 + $0x18] sm:$0xff]
        %v494 = vld [vmem:[%s3 + $0x20] sm:$0xff]
        %v495 = vld [vmem:[%s3 + $0x28] sm:$0xff]
        %v496 = vld [vmem:[%s3 + $0x30] sm:$0xff]
        %v497 = vld [vmem:[%s3 + $0x38] sm:$0xff]
        %499 = vset.pattern.permute.xlu0 0
        %500 = vperm.xlu0 %499, %v490
        %v501 = vpop.permute.xlu0 %500
        %504 = vset.pattern.permute.xlu0 0
        %505 = vperm.xlu0 %504, %v491
        %v506 = vpop.permute.xlu0 %505
        %509 = vset.pattern.permute.xlu0 0
        %510 = vperm.xlu0 %509, %v492
        %v511 = vpop.permute.xlu0 %510
        %514 = vset.pattern.permute.xlu0 0
        %515 = vperm.xlu0 %514, %v493
        %v516 = vpop.permute.xlu0 %515
        %519 = vset.pattern.permute.xlu0 0
        %520 = vperm.xlu0 %519, %v494
        %v521 = vpop.permute.xlu0 %520
        %524 = vset.pattern.permute.xlu0 0
        %525 = vperm.xlu0 %524, %v495
        %v526 = vpop.permute.xlu0 %525
        %529 = vset.pattern.permute.xlu0 0
        %530 = vperm.xlu0 %529, %v496
        %v531 = vpop.permute.xlu0 %530
        %534 = vset.pattern.permute.xlu0 0
        %535 = vperm.xlu0 %534, %v497
        %v536 = vpop.permute.xlu0 %535
        %v538 = vmul.f32 %v444, %v501
        %v539 = vmul.f32 %v446, %v501
        %v540 = vmul.f32 %v450, %v506
        %v541 = vmul.f32 %v452, %v506
        %v542 = vmul.f32 %v456, %v511
        %v543 = vmul.f32 %v458, %v511
        %v544 = vmul.f32 %v462, %v516
        %v545 = vmul.f32 %v464, %v516
        %v546 = vmul.f32 %v468, %v521
        %v547 = vmul.f32 %v470, %v521
        %v548 = vmul.f32 %v474, %v526
        %v549 = vmul.f32 %v476, %v526
        %v550 = vmul.f32 %v480, %v531
        %v551 = vmul.f32 %v482, %v531
        %v552 = vmul.f32 %v486, %v536
        %v553 = vmul.f32 %v488, %v536
        %v554 = vld [vmem:[%s4] sm:$0xff]
        %v555 = vld [vmem:[%s4 + $0x8] sm:$0xff]
        %v556 = vld [vmem:[%s4 + $0x10] sm:$0xff]
        %v557 = vld [vmem:[%s4 + $0x18] sm:$0xff]
        %v558 = vld [vmem:[%s4 + $0x20] sm:$0xff]
        %v559 = vld [vmem:[%s4 + $0x28] sm:$0xff]
        %v560 = vld [vmem:[%s4 + $0x30] sm:$0xff]
        %v561 = vld [vmem:[%s4 + $0x38] sm:$0xff]
        %563 = vset.pattern.permute.xlu0 0
        %564 = vperm.xlu0 %563, %v554
        %v565 = vpop.permute.xlu0 %564
        %568 = vset.pattern.permute.xlu0 0
        %569 = vperm.xlu0 %568, %v555
        %v570 = vpop.permute.xlu0 %569
        %573 = vset.pattern.permute.xlu0 0
        %574 = vperm.xlu0 %573, %v556
        %v575 = vpop.permute.xlu0 %574
        %578 = vset.pattern.permute.xlu0 0
        %579 = vperm.xlu0 %578, %v557
        %v580 = vpop.permute.xlu0 %579
        %583 = vset.pattern.permute.xlu0 0
        %584 = vperm.xlu0 %583, %v558
        %v585 = vpop.permute.xlu0 %584
        %588 = vset.pattern.permute.xlu0 0
        %589 = vperm.xlu0 %588, %v559
        %v590 = vpop.permute.xlu0 %589
        %593 = vset.pattern.permute.xlu0 0
        %594 = vperm.xlu0 %593, %v560
        %v595 = vpop.permute.xlu0 %594
        %598 = vset.pattern.permute.xlu0 0
        %599 = vperm.xlu0 %598, %v561
        %v600 = vpop.permute.xlu0 %599
        %v602 = vadd.f32 %v538, %v565
        %v603 = vadd.f32 %v539, %v565
        %v604 = vadd.f32 %v540, %v570
        %v605 = vadd.f32 %v541, %v570
        %v606 = vadd.f32 %v542, %v575
        %v607 = vadd.f32 %v543, %v575
        %v608 = vadd.f32 %v544, %v580
        %v609 = vadd.f32 %v545, %v580
        %v610 = vadd.f32 %v546, %v585
        %v611 = vadd.f32 %v547, %v585
        %v612 = vadd.f32 %v548, %v590
        %v613 = vadd.f32 %v549, %v590
        %v614 = vadd.f32 %v550, %v595
        %v615 = vadd.f32 %v551, %v595
        %v616 = vadd.f32 %v552, %v600
        %v617 = vadd.f32 %v553, %v600
        %v618 = vmax.f32 %v602, 0.0
        %v619 = vmax.f32 %v603, 0.0
        %v620 = vmax.f32 %v604, 0.0
        %v621 = vmax.f32 %v605, 0.0
        %v622 = vmax.f32 %v606, 0.0
        %v623 = vmax.f32 %v607, 0.0
        %v624 = vmax.f32 %v608, 0.0
        %v625 = vmax.f32 %v609, 0.0
        %v626 = vmax.f32 %v610, 0.0
        %v627 = vmax.f32 %v611, 0.0
        %v628 = vmax.f32 %v612, 0.0
        %v629 = vmax.f32 %v613, 0.0
        %v630 = vmax.f32 %v614, 0.0
        %v631 = vmax.f32 %v615, 0.0
        %v632 = vmax.f32 %v616, 0.0
        %v633 = vmax.f32 %v617, 0.0
        %v634 = vadd.f32 %v618, %v619
        %635 = vadd.xlane.f32.xlu0 %v634
        %v636 = vpop.xlane.xlu0 %635
        %v637 = vadd.f32 %v620, %v621
        %638 = vadd.xlane.f32.xlu0 %v637
        %v639 = vpop.xlane.xlu0 %638
        %v640 = vadd.f32 %v622, %v623
        %641 = vadd.xlane.f32.xlu0 %v640
        %v642 = vpop.xlane.xlu0 %641
        %v643 = vadd.f32 %v624, %v625
        %644 = vadd.xlane.f32.xlu0 %v643
        %v645 = vpop.xlane.xlu0 %644
        %v646 = vadd.f32 %v626, %v627
        %647 = vadd.xlane.f32.xlu0 %v646
        %v648 = vpop.xlane.xlu0 %647
        %v649 = vadd.f32 %v628, %v629
        %650 = vadd.xlane.f32.xlu0 %v649
        %v651 = vpop.xlane.xlu0 %650
        %v652 = vadd.f32 %v630, %v631
        %653 = vadd.xlane.f32.xlu0 %v652
        %v654 = vpop.xlane.xlu0 %653
        %v655 = vadd.f32 %v632, %v633
        %656 = vadd.xlane.f32.xlu0 %v655
        %v657 = vpop.xlane.xlu0 %656
        %v658 = vrcp.pop 256.0
        %v659 = vmul.f32 %v636, %v658
        %v660 = vmul.f32 %v639, %v658
        %v661 = vmul.f32 %v642, %v658
        %v662 = vmul.f32 %v645, %v658
        %v663 = vmul.f32 %v648, %v658
        %v664 = vmul.f32 %v651, %v658
        %v665 = vmul.f32 %v654, %v658
        %v666 = vmul.f32 %v657, %v658
        %v667 = vmax.f32 %v618, %v619
        %668 = vmax.xlane.f32.xlu0 %v667
        %v669 = vpop.xlane.xlu0 %668
        %v670 = vmax.f32 %v620, %v621
        %671 = vmax.xlane.f32.xlu0 %v670
        %v672 = vpop.xlane.xlu0 %671
        %v673 = vmax.f32 %v622, %v623
        %674 = vmax.xlane.f32.xlu0 %v673
        %v675 = vpop.xlane.xlu0 %674
        %v676 = vmax.f32 %v624, %v625
        %677 = vmax.xlane.f32.xlu0 %v676
        %v678 = vpop.xlane.xlu0 %677
        %v679 = vmax.f32 %v626, %v627
        %680 = vmax.xlane.f32.xlu0 %v679
        %v681 = vpop.xlane.xlu0 %680
        %v682 = vmax.f32 %v628, %v629
        %683 = vmax.xlane.f32.xlu0 %v682
        %v684 = vpop.xlane.xlu0 %683
        %v685 = vmax.f32 %v630, %v631
        %686 = vmax.xlane.f32.xlu0 %v685
        %v687 = vpop.xlane.xlu0 %686
        %v688 = vmax.f32 %v632, %v633
        %689 = vmax.xlane.f32.xlu0 %v688
        %v690 = vpop.xlane.xlu0 %689
        %vm691 = vcmask 7168
        %v692 = vsel %vm691, %v659, %v669
        %v693 = vsel %vm691, %v660, %v672
        %v694 = vsel %vm691, %v661, %v675
        %v695 = vsel %vm691, %v662, %v678
        %v696 = vsel %vm691, %v663, %v681
        %v697 = vsel %vm691, %v664, %v684
        %v698 = vsel %vm691, %v665, %v687
        %v699 = vsel %vm691, %v666, %v690
        %v700 = vld [vmem:[%s5] sm:$0xf]
        %vm701 = vcmask 523264
        %v703 = vsel %vm701, %v700, 0
        %705 = vmatprep.subr.mxu0 0.0
        %706 = vmatpush1.msra.mxu0 %v692
        %707 = vmatprep.subr.mxu0 0.0
        %708 = vmatpush1.msra.mxu0 %v693
        %709 = vmatprep.subr.mxu0 0.0
        %710 = vmatpush1.msra.mxu0 %v694
        %711 = vmatprep.subr.mxu0 0.0
        %712 = vmatpush1.msra.mxu0 %v695
        %713 = vmatprep.subr.mxu0 0.0
        %714 = vmatpush1.msra.mxu0 %v696
        %715 = vmatprep.subr.mxu0 0.0
        %716 = vmatpush1.msra.mxu0 %v697
        %717 = vmatprep.subr.mxu0 0.0
        %718 = vmatpush1.msra.mxu0 %v698
        %719 = vmatprep.subr.mxu0 0.0
        %720 = vmatpush1.msra.mxu0 %v699
        %721 = vmatprep.subr.mxu0 0.0
        %722 = vmatpush1.msra.mxu0 0.0
        %723 = vmatprep.subr.mxu0 0.0
        %724 = vmatpush1.msra.mxu0 0.0
        %725 = vmatprep.subr.mxu0 0.0
        %726 = vmatpush1.msra.mxu0 0.0
        %727 = vmatprep.subr.mxu0 0.0
        %728 = vmatpush1.msra.mxu0 0.0
        %729 = vmatprep.subr.mxu0 0.0
        %730 = vmatpush1.msra.mxu0 0.0
        %731 = vmatprep.subr.mxu0 0.0
        %732 = vmatpush1.msra.mxu0 0.0
        %733 = vmatprep.subr.mxu0 0.0
        %734 = vmatpush1.msra.mxu0 0.0
        %735 = vmatprep.subr.mxu0 0.0
        %736 = vmatpush1.msra.mxu0 0.0
        %737 = vmatprep.subr.mxu0 0.0
        %738 = vmatpush1.msra.mxu0 0.0
        %739 = vmatprep.subr.mxu0 0.0
        %740 = vmatpush1.msra.mxu0 0.0
        %741 = vmatprep.subr.mxu0 0.0
        %742 = vmatpush1.msra.mxu0 0.0
        %743 = vmatprep.subr.mxu0 0.0
        %744 = vmatpush1.msra.mxu0 0.0
        %745 = vmatprep.subr.mxu0 0.0
        %746 = vmatpush1.msra.mxu0 0.0
        %747 = vmatprep.subr.mxu0 0.0
        %748 = vmatpush1.msra.mxu0 0.0
        %749 = vmatprep.subr.mxu0 0.0
        %750 = vmatpush1.msra.mxu0 0.0
        %751 = vmatprep.subr.mxu0 0.0
        %752 = vmatpush1.msra.mxu0 0.0
        %753 = vmatprep.subr.mxu0 0.0
        %754 = vmatpush1.msra.mxu0 0.0
        %755 = vmatprep.subr.mxu0 0.0
        %756 = vmatpush1.msra.mxu0 0.0
        %757 = vmatprep.subr.mxu0 0.0
        %758 = vmatpush1.msra.mxu0 0.0
        %759 = vmatprep.subr.mxu0 0.0
        %760 = vmatpush1.msra.mxu0 0.0
        %761 = vmatprep.subr.mxu0 0.0
        %762 = vmatpush1.msra.mxu0 0.0
        %763 = vmatprep.subr.mxu0 0.0
        %764 = vmatpush1.msra.mxu0 0.0
        %765 = vmatprep.subr.mxu0 0.0
        %766 = vmatpush1.msra.mxu0 0.0
        %767 = vmatprep.subr.mxu0 0.0
        %768 = vmatpush1.msra.mxu0 0.0
        %769 = vmatprep.mubr.f32.mxu0 0.0
        %770 = vmatmul.mubr.f32.gmra.mrb[0].mxu0 %v703
        %v771 = vpop.f32.mrb[0].mxu0
        %v772 = vadd.f32 0.0, %v771
        %v773 = vpop.f32.mrb[0].mxu0
        %774 = vdwg.mxu0
        %v775 = vmax.f32 %v772, 0.0
        %v776 = vld [vmem:[%s6] sm:$0xff]
        %v777 = vld [vmem:[%s6 + $0x8] sm:$0xff]
        %v778 = vld [vmem:[%s6 + $0x10] sm:$0xff]
        %v779 = vld [vmem:[%s6 + $0x18] sm:$0xff]
        %v780 = vld [vmem:[%s6 + $0x20] sm:$0xff]
        %v781 = vld [vmem:[%s6 + $0x28] sm:$0xff]
        %v782 = vld [vmem:[%s6 + $0x30] sm:$0xff]
        %v783 = vld [vmem:[%s6 + $0x38] sm:$0xff]
        %vm784 = vcmask 31744
        %v786 = vsel %vm784, %v776, 0
        %v789 = vsel %vm784, %v777, 0
        %v792 = vsel %vm784, %v778, 0
        %v795 = vsel %vm784, %v779, 0
        %v798 = vsel %vm784, %v780, 0
        %v801 = vsel %vm784, %v781, 0
        %v804 = vsel %vm784, %v782, 0
        %v807 = vsel %vm784, %v783, 0
        %vm809 = vcmask 1043456
        %v811 = vsel %vm809, %v775, 0
        %813 = vmatprep.subr.mxu0 0.0
        %814 = vmatpush1.msra.mxu0 %v811
        %815 = vmatprep.subr.mxu0 0.0
        %816 = vmatpush1.msra.mxu0 0.0
        %817 = vmatprep.subr.mxu0 0.0
        %818 = vmatpush1.msra.mxu0 0.0
        %819 = vmatprep.subr.mxu0 0.0
        %820 = vmatpush1.msra.mxu0 0.0
        %821 = vmatprep.subr.mxu0 0.0
        %822 = vmatpush1.msra.mxu0 0.0
        %823 = vmatprep.subr.mxu0 0.0
        %824 = vmatpush1.msra.mxu0 0.0
        %825 = vmatprep.subr.mxu0 0.0
        %826 = vmatpush1.msra.mxu0 0.0
        %827 = vmatprep.subr.mxu0 0.0
        %828 = vmatpush1.msra.mxu0 0.0
        %829 = vmatprep.subr.mxu0 0.0
        %830 = vmatpush1.msra.mxu0 0.0
        %831 = vmatprep.subr.mxu0 0.0
        %832 = vmatpush1.msra.mxu0 0.0
        %833 = vmatprep.subr.mxu0 0.0
        %834 = vmatpush1.msra.mxu0 0.0
        %835 = vmatprep.subr.mxu0 0.0
        %836 = vmatpush1.msra.mxu0 0.0
        %837 = vmatprep.subr.mxu0 0.0
        %838 = vmatpush1.msra.mxu0 0.0
        %839 = vmatprep.subr.mxu0 0.0
        %840 = vmatpush1.msra.mxu0 0.0
        %841 = vmatprep.subr.mxu0 0.0
        %842 = vmatpush1.msra.mxu0 0.0
        %843 = vmatprep.subr.mxu0 0.0
        %844 = vmatpush1.msra.mxu0 0.0
        %845 = vmatprep.subr.mxu0 0.0
        %846 = vmatpush1.msra.mxu0 0.0
        %847 = vmatprep.subr.mxu0 0.0
        %848 = vmatpush1.msra.mxu0 0.0
        %849 = vmatprep.subr.mxu0 0.0
        %850 = vmatpush1.msra.mxu0 0.0
        %851 = vmatprep.subr.mxu0 0.0
        %852 = vmatpush1.msra.mxu0 0.0
        %853 = vmatprep.subr.mxu0 0.0
        %854 = vmatpush1.msra.mxu0 0.0
        %855 = vmatprep.subr.mxu0 0.0
        %856 = vmatpush1.msra.mxu0 0.0
        %857 = vmatprep.subr.mxu0 0.0
        %858 = vmatpush1.msra.mxu0 0.0
        %859 = vmatprep.subr.mxu0 0.0
        %860 = vmatpush1.msra.mxu0 0.0
        %861 = vmatprep.subr.mxu0 0.0
        %862 = vmatpush1.msra.mxu0 0.0
        %863 = vmatprep.subr.mxu0 0.0
        %864 = vmatpush1.msra.mxu0 0.0
        %865 = vmatprep.subr.mxu0 0.0
        %866 = vmatpush1.msra.mxu0 0.0
        %867 = vmatprep.subr.mxu0 0.0
        %868 = vmatpush1.msra.mxu0 0.0
        %869 = vmatprep.subr.mxu0 0.0
        %870 = vmatpush1.msra.mxu0 0.0
        %871 = vmatprep.subr.mxu0 0.0
        %872 = vmatpush1.msra.mxu0 0.0
        %873 = vmatprep.subr.mxu0 0.0
        %874 = vmatpush1.msra.mxu0 0.0
        %875 = vmatprep.subr.mxu0 0.0
        %876 = vmatpush1.msra.mxu0 0.0
        %877 = vmatprep.mubr.f32.mxu0 0.0
        %878 = vmatmul.mubr.f32.gmra.mrb[0].mxu0 %v786
        %v879 = vpop.f32.mrb[0].mxu0
        %v880 = vadd.f32 0.0, %v879
        %v881 = vpop.f32.mrb[0].mxu0
        %882 = vmatprep.mubr.f32.mxu0 0.0
        %883 = vmatmul.mubr.f32.gmra.mrb[0].mxu0 %v789
        %v884 = vpop.f32.mrb[0].mxu0
        %v885 = vadd.f32 0.0, %v884
        %v886 = vpop.f32.mrb[0].mxu0
        %887 = vmatprep.mubr.f32.mxu0 0.0
        %888 = vmatmul.mubr.f32.gmra.mrb[0].mxu0 %v792
        %v889 = vpop.f32.mrb[0].mxu0
        %v890 = vadd.f32 0.0, %v889
        %v891 = vpop.f32.mrb[0].mxu0
        %892 = vmatprep.mubr.f32.mxu0 0.0
        %893 = vmatmul.mubr.f32.gmra.mrb[0].mxu0 %v795
        %v894 = vpop.f32.mrb[0].mxu0
        %v895 = vadd.f32 0.0, %v894
        %v896 = vpop.f32.mrb[0].mxu0
        %897 = vmatprep.mubr.f32.mxu0 0.0
        %898 = vmatmul.mubr.f32.gmra.mrb[0].mxu0 %v798
        %v899 = vpop.f32.mrb[0].mxu0
        %v900 = vadd.f32 0.0, %v899
        %v901 = vpop.f32.mrb[0].mxu0
        %902 = vmatprep.mubr.f32.mxu0 0.0
        %903 = vmatmul.mubr.f32.gmra.mrb[0].mxu0 %v801
        %v904 = vpop.f32.mrb[0].mxu0
        %v905 = vadd.f32 0.0, %v904
        %v906 = vpop.f32.mrb[0].mxu0
        %907 = vmatprep.mubr.f32.mxu0 0.0
        %908 = vmatmul.mubr.f32.gmra.mrb[0].mxu0 %v804
        %v909 = vpop.f32.mrb[0].mxu0
        %v910 = vadd.f32 0.0, %v909
        %v911 = vpop.f32.mrb[0].mxu0
        %912 = vmatprep.mubr.f32.mxu0 0.0
        %913 = vmatmul.mubr.f32.gmra.mrb[0].mxu0 %v807
        %v914 = vpop.f32.mrb[0].mxu0
        %v915 = vadd.f32 0.0, %v914
        %v916 = vpop.f32.mrb[0].mxu0
        %917 = vdwg.mxu0
        %vm918 = vcmask 15360
        %v919 = vsel %vm918, %v880, 0.0
        %920 = vadd.xlane.f32.xlu0 %v919
        %v921 = vpop.xlane.xlu0 %920
        %v922 = vsel %vm918, %v885, 0.0
        %923 = vadd.xlane.f32.xlu0 %v922
        %v924 = vpop.xlane.xlu0 %923
        %v925 = vsel %vm918, %v890, 0.0
        %926 = vadd.xlane.f32.xlu0 %v925
        %v927 = vpop.xlane.xlu0 %926
        %v928 = vsel %vm918, %v895, 0.0
        %929 = vadd.xlane.f32.xlu0 %v928
        %v930 = vpop.xlane.xlu0 %929
        %v931 = vsel %vm918, %v900, 0.0
        %932 = vadd.xlane.f32.xlu0 %v931
        %v933 = vpop.xlane.xlu0 %932
        %v934 = vsel %vm918, %v905, 0.0
        %935 = vadd.xlane.f32.xlu0 %v934
        %v936 = vpop.xlane.xlu0 %935
        %v937 = vsel %vm918, %v910, 0.0
        %938 = vadd.xlane.f32.xlu0 %v937
        %v939 = vpop.xlane.xlu0 %938
        %v940 = vsel %vm918, %v915, 0.0
        %941 = vadd.xlane.f32.xlu0 %v940
        %v942 = vpop.xlane.xlu0 %941
        %v943 = vxor.u32 %v921, 2147483648
        %v944 = vxor.u32 %v924, 2147483648
        %v945 = vxor.u32 %v927, 2147483648
        %v946 = vxor.u32 %v930, 2147483648
        %v947 = vxor.u32 %v933, 2147483648
        %v948 = vxor.u32 %v936, 2147483648
        %v949 = vxor.u32 %v939, 2147483648
        %v950 = vxor.u32 %v942, 2147483648
        %v951 = vmul.f32 %v943, 1.442695
        %v952 = vpow.pop %v951
        %v953 = vmul.f32 %v944, 1.442695
        %v954 = vpow.pop %v953
        %v955 = vmul.f32 %v945, 1.442695
        %v956 = vpow.pop %v955
        %v957 = vmul.f32 %v946, 1.442695
        %v958 = vpow.pop %v957
        %v959 = vmul.f32 %v947, 1.442695
        %v960 = vpow.pop %v959
        %v961 = vmul.f32 %v948, 1.442695
        %v962 = vpow.pop %v961
        %v963 = vmul.f32 %v949, 1.442695
        %v964 = vpow.pop %v963
        %v965 = vmul.f32 %v950, 1.442695
        %v966 = vpow.pop %v965
        %v967 = vadd.f32 %v952, 1.0
        %v968 = vadd.f32 %v954, 1.0
        %v969 = vadd.f32 %v956, 1.0
        %v970 = vadd.f32 %v958, 1.0
        %v971 = vadd.f32 %v960, 1.0
        %v972 = vadd.f32 %v962, 1.0
        %v973 = vadd.f32 %v964, 1.0
        %v974 = vadd.f32 %v966, 1.0
        %v975 = vrcp.pop %v967
        %v976 = vmul.f32 1.0, %v975
        %v977 = vrcp.pop %v968
        %v978 = vmul.f32 1.0, %v977
        %v979 = vrcp.pop %v969
        %v980 = vmul.f32 1.0, %v979
        %v981 = vrcp.pop %v970
        %v982 = vmul.f32 1.0, %v981
        %v983 = vrcp.pop %v971
        %v984 = vmul.f32 1.0, %v983
        %v985 = vrcp.pop %v972
        %v986 = vmul.f32 1.0, %v985
        %v987 = vrcp.pop %v973
        %v988 = vmul.f32 1.0, %v987
        %v989 = vrcp.pop %v974
        %v990 = vmul.f32 1.0, %v989
        %v991 = vadd.f32 %v976, 1.0
        %v992 = vadd.f32 %v978, 1.0
        %v993 = vadd.f32 %v980, 1.0
        %v994 = vadd.f32 %v982, 1.0
        %v995 = vadd.f32 %v984, 1.0
        %v996 = vadd.f32 %v986, 1.0
        %v997 = vadd.f32 %v988, 1.0
        %v998 = vadd.f32 %v990, 1.0
        %v999 = vmul.f32 %v618, %v991
        %v1000 = vmul.f32 %v619, %v991
        %v1001 = vmul.f32 %v620, %v992
        %v1002 = vmul.f32 %v621, %v992
        %v1003 = vmul.f32 %v622, %v993
        %v1004 = vmul.f32 %v623, %v993
        %v1005 = vmul.f32 %v624, %v994
        %v1006 = vmul.f32 %v625, %v994
        %v1007 = vmul.f32 %v626, %v995
        %v1008 = vmul.f32 %v627, %v995
        %v1009 = vmul.f32 %v628, %v996
        %v1010 = vmul.f32 %v629, %v996
        %v1011 = vmul.f32 %v630, %v997
        %v1012 = vmul.f32 %v631, %v997
        %v1013 = vmul.f32 %v632, %v998
        %v1014 = vmul.f32 %v633, %v998
        %1015 = vst [vmem:[%s336] sm:$0xff] %v999
        %1016 = vst [vmem:[%s336 + $0x8] sm:$0xff] %v1000
        %1017 = vst [vmem:[%s336 + $0x10] sm:$0xff] %v1001
        %1018 = vst [vmem:[%s336 + $0x18] sm:$0xff] %v1002
        %1019 = vst [vmem:[%s336 + $0x20] sm:$0xff] %v1003
        %1020 = vst [vmem:[%s336 + $0x28] sm:$0xff] %v1004
        %1021 = vst [vmem:[%s336 + $0x30] sm:$0xff] %v1005
        %1022 = vst [vmem:[%s336 + $0x38] sm:$0xff] %v1006
        %1023 = vst [vmem:[%s336 + $0x40] sm:$0xff] %v1007
        %1024 = vst [vmem:[%s336 + $0x48] sm:$0xff] %v1008
        %1025 = vst [vmem:[%s336 + $0x50] sm:$0xff] %v1009
        %1026 = vst [vmem:[%s336 + $0x58] sm:$0xff] %v1010
        %1027 = vst [vmem:[%s336 + $0x60] sm:$0xff] %v1011
        %1028 = vst [vmem:[%s336 + $0x68] sm:$0xff] %v1012
        %1029 = vst [vmem:[%s336 + $0x70] sm:$0xff] %v1013
        %1030 = vst [vmem:[%s336 + $0x78] sm:$0xff] %v1014
        %s1031 = sand.u32 %s192, 1
        %s1032 = scalar_lea.sflag [#allocation4], %s1031
        %s1033 = sand.u32 %s192, 1
        %s1034 = smul.addr %s1033, 128
        %s1035 = scalar_lea.vmem [#allocation7], %s1034
        // Predicated region
        $region57: #{tpu_custom_call.1} parent=47 // pred_check
          %p1036 = pneg %p202
        $region58: #{tpu_custom_call.1} parent=47 // pred_check_branch
          %1038 = sbr.rel (%p1036) target = $region60
        $region59: #{tpu_custom_call.1} parent=47 // pred_region
          %s1040 = ssub.s32 2048, 2048
          %1041 = vsyncadd %s1032, %s1040
          %s1042 = smul.addr %s27, 16
          %s1043 = smul.addr %s1042, 128
          %s1044 = scalar_lea.hbm %s7, %s1043
          %s1045 = sshll.u32 %s1035, 4
          %s1046 = int_to_ptr.vmem [resolvable:$true] %s1045
          %1051 = dma.vmem_to_hbm [thread:$0]  %s1046, 2048, %s1044, %s1032, 256, 256, 16
        $region60: #{tpu_custom_call.1} parent=47 // pred_fallthru
          _
      $region48: #{tpu_custom_call.1} parent=5 // pred_fallthru
        _
      %p1052 = scmp.le.s32.totalorder 2, %s22
      // Predicated region
      $region61: #{tpu_custom_call.1} parent=5 // pred_check
        %p1053 = pneg %p1052
      $region62: #{tpu_custom_call.1} parent=5 // pred_check_branch
        %1055 = sbr.rel (%p1053) target = $region64
      $region63: #{tpu_custom_call.1} parent=5 // pred_region
        %s1056 = ssub.s32 %s22, 2
        // Predicated region
        $region65: #{tpu_custom_call.1} parent=63 // pred_check
          %p1057 = pneg %p208
        $region66: #{tpu_custom_call.1} parent=63 // pred_check_branch
          %1059 = sbr.rel (%p1057) target = $region68
        $region67: #{tpu_custom_call.1} parent=63 // pred_region
          %s1060 = sand.u32 %s193, 1
          %s1061 = scalar_lea.sflag [#allocation4], %s1060
          %s1062 = sand.u32 %s193, 1
          %s1063 = smul.addr %s1062, 128
          %s1064 = scalar_lea.vmem [#allocation7], %s1063
          %1065 = dma.done %s1061, 2048
        $region68: #{tpu_custom_call.1} parent=63 // pred_fallthru
          _
      $region64: #{tpu_custom_call.1} parent=5 // pred_fallthru
        _
    $region6: #{tpu_custom_call.1} parent=1 // loop_footer
      %s26 = sadd.s32 1, %s22
    $region7: #{tpu_custom_call.1} parent=1 // loop_footer_branch
      %21 = sbr.rel target = $region3
    $region8: #{tpu_custom_call.1} parent=1 // loop_exit
      _
    %1066 = vsyncpa [#allocation3], 1
    %s1067 = scalar_lea.sflag [#allocation3], 1
    %1068 = vsyncpa %s1067, 1
    %1069 = vsyncpa [#allocation6], 1
    %s1070 = scalar_lea.sflag [#allocation6], 1
    %1071 = vsyncpa %s1070, 1
    %1072 = vsyncpa [#allocation4], 1
    %s1073 = scalar_lea.sflag [#allocation4], 1
    %1074 = vsyncpa %s1073, 1

</llo_original>
